<compile_context>
chip_gen: v7x
topology: tpu7x:2x2x1
jax: 0.10.0
libtpu: 0.0.40
codegen_flags: <defaults>
</compile_context>

<pallas_src>
from functools import partial

import jax
import jax.numpy as jnp
from jax.experimental import pallas as pl
from jax.experimental.pallas import tpu as pltpu


# ----------------------------------------------------------------------------
# Small helpers
# ----------------------------------------------------------------------------
def _round_up(v, m):
    return (v + m - 1) // m * m


def _pick_tile(padded, target, granularity):
    """Largest multiple of `granularity` that is <= `target` and divides `padded`."""
    t = min(target, padded)
    t -= t % granularity
    t = max(t, granularity)
    while padded % t != 0:
        t -= granularity
    return t


# ----------------------------------------------------------------------------
# Pallas kernels
# ----------------------------------------------------------------------------
def _fused_gemm_kernel(*refs, has_pre, pre_relu, has_post, post_relu):
    """One (tm, tn) output tile, single K step (whole K in VMEM, no accumulator).

    y = post_affine( pre_affine(x) @ w ), optional affines / ReLUs selected at
    compile time so identity affines cost nothing.
    """
    it = iter(refs)
    x_ref = next(it)
    ps_ref = next(it) if has_pre else None
    pb_ref = next(it) if has_pre else None
    w_ref = next(it)
    qs_ref = next(it) if has_post else None
    qb_ref = next(it) if has_post else None
    o_ref = next(it)

    if has_pre:
        h = x_ref[...].astype(jnp.float32) * ps_ref[...] + pb_ref[...]
        if pre_relu:
            h = jnp.maximum(h, 0.0)
        h = h.astype(jnp.bfloat16)
    else:
        h = x_ref[...]
        if pre_relu:
            h = jnp.maximum(h, 0)

    y = jnp.dot(h, w_ref[...], preferred_element_type=jnp.float32)
    if has_post:
        y = y * qs_ref[...] + qb_ref[...]
    if post_relu:
        y = jnp.maximum(y, 0.0)
    o_ref[...] = y.astype(o_ref.dtype)


def _head_kernel(x_ref, w1_ref, b1_ref, w2_ref, b2_ref, o_ref):
    """Fused classifier head: Linear(1024,1024) -> ReLU -> Dropout(id) -> Linear(1024,C)."""
    h = jnp.dot(x_ref[...], w1_ref[...],
                preferred_element_type=jnp.float32) + b1_ref[...]
    h = jnp.maximum(h, 0.0)
    # TODO(synk): Dropout(p=0.3) is identity in inference mode; stochastic
    # training-mode dropout is not implemented.
    y = jnp.dot(h.astype(jnp.bfloat16), w2_ref[...],
                preferred_element_type=jnp.float32) + b2_ref[...]
    o_ref[...] = y


# ----------------------------------------------------------------------------
# Pallas call wrappers
# ----------------------------------------------------------------------------
@partial(jax.jit,
         static_argnames=("n_out", "has_pre", "pre_relu", "has_post", "post_relu"))
def _fused_gemm_impl(x, w, pre_s, pre_b, post_s, post_b,
                     *, n_out, has_pre, pre_relu, has_post, post_relu):
    """x: (M, K) unpadded; w: (Kp, Np) pre-padded bf16; affines: (1, Kp)/(1, Np) f32."""
    M, K = x.shape
    Kp, Np = w.shape

    # Tile selection.  tk = Kp always (every GEMM in this model has Kp <= 1152):
    # the x (tm x Kp) + w (Kp x tn) bf16 tiles double-buffered stay ~2 MiB/step,
    # well under v7x's 64 MiB physical / the 32 MiB scoped limit.
    if M >= 256:
        tm = 256
        Mp = _round_up(M, tm)
    else:
        Mp = _round_up(M, 8)
        tm = Mp
    tk = Kp
    tn = _pick_tile(Np, 256, 128)
    gm, gn = Mp // tm, Np // tn

    xp = x.astype(jnp.bfloat16)
    if Mp != M or Kp != K:
        xp = jnp.pad(xp, ((0, Mp - M), (0, Kp - K)))

    operands = [xp]
    in_specs = [pl.BlockSpec((tm, tk), lambda j, i: (i, 0))]
    if has_pre:
        operands += [pre_s, pre_b]
        in_specs += [pl.BlockSpec((1, tk), lambda j, i: (0, 0)),
                     pl.BlockSpec((1, tk), lambda j, i: (0, 0))]
    operands += [w]
    in_specs += [pl.BlockSpec((tk, tn), lambda j, i: (0, j))]
    if has_post:
        operands += [post_s, post_b]
        in_specs += [pl.BlockSpec((1, tn), lambda j, i: (0, j)),
                     pl.BlockSpec((1, tn), lambda j, i: (0, j))]

    cost = pl.CostEstimate(
        flops=2 * Mp * Kp * Np,
        transcendentals=0,
        bytes_accessed=xp.size * 2 * gn + w.size * 2 + Mp * Np * 2,
    )

    out = pl.pallas_call(
        partial(_fused_gemm_kernel, has_pre=has_pre, pre_relu=pre_relu,
                has_post=has_post, post_relu=post_relu),
        out_shape=jax.ShapeDtypeStruct((Mp, Np), jnp.bfloat16),
        grid_spec=pltpu.PrefetchScalarGridSpec(
            num_scalar_prefetch=0,
            # M innermost: the weight tile index only changes with j, so weights
            # are not re-fetched per M-tile (matters on bandwidth-poor v5e).
            grid=(gn, gm),
            in_specs=in_specs,
            out_specs=pl.BlockSpec((tm, tn), lambda j, i: (i, j)),
        ),
        compiler_params=pltpu.CompilerParams(
            dimension_semantics=("parallel", "parallel"),
            vmem_limit_bytes=32 * 1024 * 1024,
        ),
        cost_estimate=cost,
    )(*operands)

    if Mp != M or Np != n_out:
        out = out[:M, :n_out]
    return out


def fused_affine_gemm(x, layer, *, pre_relu, post_relu):
    return _fused_gemm_impl(
        x, layer["w"],
        layer.get("pre_s"), layer.get("pre_b"),
        layer.get("post_s"), layer.get("post_b"),
        n_out=layer["nout"],
        has_pre=layer["has_pre"], pre_relu=pre_relu,
        has_post=layer["has_post"], post_relu=post_relu)


@partial(jax.jit, static_argnames=("num_classes",))
def _classifier_head_impl(pooled, w1, b1, w2, b2, *, num_classes):
    Nb, Cin = pooled.shape
    Kp, Hh = w1.shape
    Np2 = w2.shape[1]
    Mp = _round_up(Nb, 8)
    xp = pooled.astype(jnp.bfloat16)                  # bf16 activations into the kernel
    if Mp != Nb or Kp != Cin:
        xp = jnp.pad(xp, ((0, Mp - Nb), (0, Kp - Cin)))

    cost = pl.CostEstimate(
        flops=2 * Mp * Kp * Hh + 2 * Mp * Hh * Np2,
        transcendentals=0,
        bytes_accessed=xp.size * 2 + w1.size * 2 + w2.size * 2 + Mp * Np2 * 4,
    )
    out = pl.pallas_call(
        _head_kernel,
        out_shape=jax.ShapeDtypeStruct((Mp, Np2), jnp.float32),
        grid_spec=pltpu.PrefetchScalarGridSpec(
            num_scalar_prefetch=0,
            grid=(1,),
            in_specs=[
                pl.BlockSpec((Mp, Kp), lambda i: (0, 0)),
                pl.BlockSpec((Kp, Hh), lambda i: (0, 0)),
                pl.BlockSpec((1, Hh), lambda i: (0, 0)),
                pl.BlockSpec((Hh, Np2), lambda i: (0, 0)),
                pl.BlockSpec((1, Np2), lambda i: (0, 0)),
            ],
            out_specs=pl.BlockSpec((Mp, Np2), lambda i: (0, 0)),
        ),
        compiler_params=pltpu.CompilerParams(
            dimension_semantics=("arbitrary",),
            vmem_limit_bytes=32 * 1024 * 1024,
        ),
        cost_estimate=cost,
    )(xp, w1, b1, w2, b2)
    return out[:Nb, :num_classes]


def classifier_head(pooled, cls):
    return _classifier_head_impl(pooled, cls["w1"], cls["b1"], cls["w2"], cls["b2"],
                                 num_classes=cls["num_classes"])


# ----------------------------------------------------------------------------
# Glue (im2col / pooling) in lane-dense NHWC — no NCHW<->rows transposes
# ----------------------------------------------------------------------------
def im2col_nhwc(x, kh, kw, stride, pad):
    """x: (N,H,W,C) -> ((N*Ho*Wo, kh*kw*C), (N,Ho,Wo)); column order (di, dj, c)."""
    # TODO(synk): this materializes the 9x-larger cols tensor in HBM via XLA;
    # in-kernel 3x3 tap accumulation is not implemented.
    N, H, W, C = x.shape
    Ho = (H + 2 * pad - kh) // stride + 1
    Wo = (W + 2 * pad - kw) // stride + 1
    xp = jnp.pad(x, ((0, 0), (pad, pad), (pad, pad), (0, 0)))
    cols = []
    for di in range(kh):
        for dj in range(kw):
            cols.append(xp[:, di:di + stride * Ho:stride, dj:dj + stride * Wo:stride, :])
    patches = jnp.concatenate(cols, axis=-1)          # (N, Ho, Wo, kh*kw*C)
    return patches.reshape(N * Ho * Wo, kh * kw * C), (N, Ho, Wo)


def max_pool_3x3_s2_p1_nhwc(x):
    N, H, W, C = x.shape
    Ho = (H + 2 - 3) // 2 + 1
    Wo = (W + 2 - 3) // 2 + 1
    xp = jnp.pad(x, ((0, 0), (1, 1), (1, 1), (0, 0)), constant_values=-jnp.inf)
    out = None
    for di in range(3):
        for dj in range(3):
            p = xp[:, di:di + 2 * Ho:2, dj:dj + 2 * Wo:2, :]
            out = p if out is None else jnp.maximum(out, p)
    return out


# ----------------------------------------------------------------------------
# DenseNet121 forward built from the fused Pallas GEMM
# ----------------------------------------------------------------------------
def dense_layer(feat, p):
    """feat: (N, H, W, C) bf16 NHWC.  BN1-ReLU-conv1x1-BN2-ReLU-conv3x3, concat."""
    N, H, W, C = feat.shape
    x2d = feat.reshape(N * H * W, C)
    # BN1 + ReLU -> conv1x1 -> BN2 + ReLU   (one fused Pallas GEMM)
    h = fused_affine_gemm(x2d, p["l1"], pre_relu=True, post_relu=True)   # (M, 128)
    h4 = h.reshape(N, H, W, -1)
    cols, _ = im2col_nhwc(h4, 3, 3, 1, 1)                                # (M, 1152)
    # 3x3 conv: identity pre/post affine -> "no-pre/no-post" kernel variant
    new = fused_affine_gemm(cols, p["l2"], pre_relu=False, post_relu=False)  # (M, 32)
    new4 = new.reshape(N, H, W, -1)
    # TODO(synk): channel concat is an XLA copy of the growing feature map;
    # writing new channels into a pre-allocated slab via input_output_aliases
    # is not implemented.
    return jnp.concatenate([feat, new4], axis=-1)


def transition(feat, p):
    """BN + ReLU + conv1x1 (fused GEMM) + AvgPool2d(2,2)."""
    # TODO(synk): the 2x2 average pool is XLA glue, not fused into the GEMM finalize.
    N, H, W, C = feat.shape
    x2d = feat.reshape(N * H * W, C)
    h = fused_affine_gemm(x2d, p["l"], pre_relu=True, post_relu=False)
    Cout = h.shape[-1]
    h4 = h.reshape(N, H, W, Cout).astype(jnp.float32)
    pooled = h4.reshape(N, H // 2, 2, W // 2, 2, Cout).mean(axis=(2, 4))
    return pooled.astype(jnp.bfloat16)


def retinal_classifier_forward(params, x):
    """Forward pass. x: (N, 3, H, W) NCHW (PyTorch convention). Returns (logits, None)."""
    x = jnp.transpose(x, (0, 2, 3, 1))                # NCHW -> NHWC once at the boundary
    N = x.shape[0]

    # --- stem: conv7x7/s2/p3 -> BN -> ReLU -> maxpool3x3/s2/p1
    cols, (_, Ho, Wo) = im2col_nhwc(x, 7, 7, 2, 3)
    h = fused_affine_gemm(cols, params["stem"], pre_relu=False, post_relu=True)
    feat = h.reshape(N, Ho, Wo, -1)
    feat = max_pool_3x3_s2_p1_nhwc(feat)

    # --- dense blocks + transitions
    for bi, block in enumerate(params["blocks"]):
        for layer in block:
            feat = dense_layer(feat, layer)
        if bi < len(params["transitions"]):
            feat = transition(feat, params["transitions"][bi])

    # --- final BN + ReLU + global average pool (tiny elementwise/reduction glue)
    s5 = params["norm5"]["s"]
    b5 = params["norm5"]["b"]
    act = jnp.maximum(feat.astype(jnp.float32) * s5 + b5, 0.0)
    pooled = act.mean(axis=(1, 2))                    # (N, 1024)

    # --- classifier head: one fused Pallas call (Linear -> ReLU -> Dropout(id) -> Linear)
    logits = classifier_head(pooled, params["cls"])
    return logits, None


# ----------------------------------------------------------------------------
# Deterministic synthetic parameters (DenseNet121: 64 feats, growth 32, (6,12,24,16))
# Weights are pre-padded to (round_up(K,128), round_up(N,128)) and pre-cast to bf16.
# ----------------------------------------------------------------------------
def _fold_bn(gamma, beta, rm, rv, eps=1e-5):
    s = gamma / jnp.sqrt(rv + eps)
    return s, beta - rm * s


def _pad2(a, rows, cols, dtype):
    r, c = a.shape
    return jnp.pad(a.astype(dtype), ((0, rows - r), (0, cols - c)))


def _pad_row(v, cols):
    # Padded entries are zero so padded K/N columns contribute nothing.
    return jnp.pad(v.astype(jnp.float32), (0, cols - v.shape[0])).reshape(1, cols)


def _gemm_layer(w, pre_s=None, pre_b=None, post_s=None, post_b=None):
    K, N = w.shape
    Kp, Np = _round_up(K, 128), _round_up(N, 128)
    layer = {
        "w": _pad2(w, Kp, Np, jnp.bfloat16),          # pre-padded, bf16; pad rows/cols zero
        "nout": N,
        "has_pre": pre_s is not None,
        "has_post": post_s is not None,
    }
    if layer["has_pre"]:
        layer["pre_s"] = _pad_row(pre_s, Kp)
        layer["pre_b"] = _pad_row(pre_b, Kp)
    if layer["has_post"]:
        layer["post_s"] = _pad_row(post_s, Np)
        layer["post_b"] = _pad_row(post_b, Np)
    return layer


def init_params(key, num_classes=3, growth=32, init_feats=64, bn_size=4,
                block_config=(6, 12, 24, 16)):
    cnt = [0]

    def nk():
        cnt[0] += 1
        return jax.random.fold_in(key, cnt[0])

    def conv_w(k_in, k_out):
        return jax.random.normal(nk(), (k_in, k_out), jnp.float32) * jnp.sqrt(2.0 / k_in)

    def bn(c):
        gamma = 1.0 + 0.1 * jax.random.normal(nk(), (c,), jnp.float32)
        beta = 0.1 * jax.random.normal(nk(), (c,), jnp.float32)
        rm = 0.1 * jax.random.normal(nk(), (c,), jnp.float32)
        rv = 1.0 + 0.1 * jax.random.uniform(nk(), (c,), jnp.float32)
        return _fold_bn(gamma, beta, rm, rv)

    params = {}
    # Stem has no pre-affine (raw pixels in) -> "no-pre" kernel variant.
    s0, b0 = bn(init_feats)
    params["stem"] = _gemm_layer(conv_w(3 * 7 * 7, init_feats), post_s=s0, post_b=b0)

    blocks, transitions = [], []
    c = init_feats
    for bi, nl in enumerate(block_config):
        layers = []
        for _ in range(nl):
            s1, b1 = bn(c)
            s2, b2 = bn(bn_size * growth)
            l1 = _gemm_layer(conv_w(c, bn_size * growth),
                             pre_s=s1, pre_b=b1, post_s=s2, post_b=b2)
            # 3x3 conv: BN2+ReLU already fused as l1's post-affine, no BN after ->
            # identity pre/post affines -> no-pre/no-post kernel variant.
            l2 = _gemm_layer(conv_w(bn_size * growth * 9, growth))
            layers.append({"l1": l1, "l2": l2})
            c += growth
        blocks.append(layers)
        if bi != len(block_config) - 1:
            st, bt = bn(c)
            transitions.append({"l": _gemm_layer(conv_w(c, c // 2), pre_s=st, pre_b=bt)})
            c //= 2
    params["blocks"] = blocks
    params["transitions"] = transitions

    s5, b5 = bn(c)                                    # c == 1024 for DenseNet121
    params["norm5"] = {"s": s5, "b": b5}

    hidden = 1024
    np2 = _round_up(num_classes, 128)
    w1 = jax.random.normal(nk(), (c, hidden), jnp.float32) * jnp.sqrt(1.0 / c)
    w2 = jax.random.normal(nk(), (hidden, num_classes), jnp.float32) * jnp.sqrt(1.0 / hidden)
    params["cls"] = {
        "w1": _pad2(w1, _round_up(c, 128), hidden, jnp.bfloat16),
        "b1": jnp.zeros((1, hidden), jnp.float32),
        "w2": _pad2(w2, hidden, np2, jnp.bfloat16),
        "b2": jnp.zeros((1, np2), jnp.float32),
        "num_classes": num_classes,
    }
    return params


# ----------------------------------------------------------------------------
if __name__ == "__main__":
    key = jax.random.PRNGKey(0)
    pkey, xkey = jax.random.split(key)
    params = init_params(pkey, num_classes=3)
    # Small NCHW input: 32x32 is enough for the 5 stride-2 stages of DenseNet121.
    x = jax.random.normal(xkey, (2, 3, 32, 32), jnp.float32)

    logits, aux = retinal_classifier_forward(params, x)
    logits = jax.block_until_ready(logits)

    assert logits.shape == (2, 3), logits.shape
    assert aux is None
    assert bool(jnp.all(jnp.isfinite(logits)))
    print("KERNEL_OK")
</pallas_src>

<mosaic_0001>
module attributes {stable_mosaic.version = 11 : i64} {
  func.func @_fused_gemm_kernel(%arg0: i32, %arg1: i32, %arg2: memref<256x256xbf16, #tpu.memory_space<vmem>>, %arg3: memref<256x128xbf16, #tpu.memory_space<vmem>>, %arg4: memref<1x128xf32, #tpu.memory_space<vmem>>, %arg5: memref<1x128xf32, #tpu.memory_space<vmem>>, %arg6: memref<256x128xbf16, #tpu.memory_space<vmem>>) attributes {dimension_semantics = [#tpu.dimension_semantics<parallel>, #tpu.dimension_semantics<parallel>], iteration_bounds = array<i64: 1, 2>, scalar_prefetch = 0 : i64, scratch_operands = 0 : i64, tpu.core_type = #tpu.core_type<tc>, window_params = [{transform_indices = @transform_0, window_bounds = array<i64: 256, 256>}, {transform_indices = @transform_1, window_bounds = array<i64: 256, 128>}, {transform_indices = @transform_2, window_bounds = array<i64: 1, 128>}, {transform_indices = @transform_3, window_bounds = array<i64: 1, 128>}, {transform_indices = @transform_4, window_bounds = array<i64: 256, 128>}]} {
    %c0 = arith.constant 0 : index
    %c0_0 = arith.constant 0 : index
    %0 = vector.load %arg2[%c0, %c0_0] : memref<256x256xbf16, #tpu.memory_space<vmem>>, vector<256x256xbf16>
    %c0_1 = arith.constant 0 : index
    %c0_2 = arith.constant 0 : index
    %1 = vector.load %arg3[%c0_1, %c0_2] : memref<256x128xbf16, #tpu.memory_space<vmem>>, vector<256x128xbf16>
    %cst = arith.constant dense<0.000000e+00> : vector<256x128xf32>
    %2 = tpu.matmul %0, %1, %cst {dimension_numbers = #tpu.dot_dimension_numbers<[1], [0], [0], [1], [0, 0, 1, 1], [], []>} : vector<256x256xbf16>, vector<256x128xbf16>, vector<256x128xf32> -> vector<256x128xf32>
    %c0_3 = arith.constant 0 : index
    %c0_4 = arith.constant 0 : index
    %3 = vector.load %arg4[%c0_3, %c0_4] : memref<1x128xf32, #tpu.memory_space<vmem>>, vector<1x128xf32>
    %4 = vector.broadcast %3 : vector<1x128xf32> to vector<256x128xf32>
    %5 = arith.mulf %2, %4 : vector<256x128xf32>
    %c0_5 = arith.constant 0 : index
    %c0_6 = arith.constant 0 : index
    %6 = vector.load %arg5[%c0_5, %c0_6] : memref<1x128xf32, #tpu.memory_space<vmem>>, vector<1x128xf32>
    %7 = vector.broadcast %6 : vector<1x128xf32> to vector<256x128xf32>
    %8 = arith.addf %5, %7 : vector<256x128xf32>
    %cst_7 = arith.constant 0.000000e+00 : f32
    %9 = vector.broadcast %cst_7 : f32 to vector<256x128xf32>
    %10 = arith.maximumf %8, %9 : vector<256x128xf32>
    %11 = arith.truncf %10 : vector<256x128xf32> to vector<256x128xbf16>
    %c0_8 = arith.constant 0 : index
    %c0_9 = arith.constant 0 : index
    %12 = vector.load %arg6[%c0_8, %c0_9] : memref<256x128xbf16, #tpu.memory_space<vmem>>, vector<256x128xbf16>
    tpu.vector_store %arg6[%c0_8, %c0_9], %11 {strides = array<i32>} : memref<256x128xbf16, #tpu.memory_space<vmem>>, vector<256x128xbf16>,
    return
  }
  func.func @transform_0(%arg0: i32, %arg1: i32) -> (i32, i32) {
    %c0_i32 = arith.constant 0 : i32
    %c0_i32_0 = arith.constant 0 : i32
    return %arg1, %c0_i32 : i32, i32
  }
  func.func @transform_1(%arg0: i32, %arg1: i32) -> (i32, i32) {
    %c0_i32 = arith.constant 0 : i32
    %c0_i32_0 = arith.constant 0 : i32
    return %c0_i32, %arg0 : i32, i32
  }
  func.func @transform_2(%arg0: i32, %arg1: i32) -> (i32, i32) {
    %c0_i32 = arith.constant 0 : i32
    %c0_i32_0 = arith.constant 0 : i32
    return %c0_i32, %arg0 : i32, i32
  }
  func.func @transform_3(%arg0: i32, %arg1: i32) -> (i32, i32) {
    %c0_i32 = arith.constant 0 : i32
    %c0_i32_0 = arith.constant 0 : i32
    return %c0_i32, %arg0 : i32, i32
  }
  func.func @transform_4(%arg0: i32, %arg1: i32) -> (i32, i32) {
    %c0_i32 = arith.constant 0 : i32
    return %arg1, %arg0 : i32, i32
  }
}

</mosaic_0001>

<llo_original>
// kernel: _fused_gemm_impl.1
$region0: #{_fused_gemm_impl.1}
  #allocation0 [shape = 'u32[]', space=smem, size = 0x4, offset = 0x4, fixed_abs, tag = 'smem constant byte address 0x4 - core index']
  #allocation1 [shape = 'u32[144,128]{1,0:T(1,128)}', space=vmem, size = 0x12000, scoped, tag = 'internal scratch']
  %s0 = inlined_call_operand.vmem [shape: bf16[512,256], index: 0, kind: input, shape index: {}]
  %s1 = inlined_call_operand.vmem [shape: bf16[256,128], index: 1, kind: input, shape index: {}]
  %s2 = inlined_call_operand.vmem [shape: f32[1,128], index: 2, kind: input, shape index: {}]
  %s3 = inlined_call_operand.vmem [shape: f32[1,128], index: 3, kind: input, shape index: {}]
  %s4 = inlined_call_operand.vmem [shape: bf16[512,128], index: 4, kind: output, shape index: {}]
  %s5 = sld [smem:[#allocation0]]
  $region49: #{_fused_gemm_impl.1} parent=0
    _
  %s7 = ssub.s32 1, %s5
  %s8 = scalar_select 0, %s7, %s5
  loop: start=0, step=1, limit=4
  $region2: #{_fused_gemm_impl.1} parent=0 // loop_pre_header
    _
  $region3: #{_fused_gemm_impl.1} parent=0 // loop_header
    %s10 = sphi 0, %s14
    %p11 = scmp.ge.s32.totalorder %s10, 4
    %s17 = sphi 0, %s29
    %s18 = sphi 0, %s25
    %s19 = sphi 0, %s17
    %s20 = sphi 0, %s18
    %s21 = sphi 0, %s19
    %s22 = sphi 0, %s20
    %s32 = sphi 0, %s34
    %s35 = sphi 0, %s32
    %s36 = sphi 0, %s35
    %s52 = sphi 0, %s36
    %s58 = sphi 0, %s60
    %s61 = sphi 0, %s58
    %s62 = sphi 0, %s61
    %s78 = sphi 0, %s62
    %s84 = sphi 0, %s86
    %s87 = sphi 0, %s84
    %s88 = sphi 0, %s87
    %s104 = sphi 0, %s88
    %s110 = sphi 0, %s112
    %s113 = sphi 0, %s110
    %s114 = sphi 0, %s113
    %s130 = sphi 0, %s114
    %s138 = sphi 0, %s140
    %s141 = sphi 0, %s138
    %s142 = sphi 0, %s141
    %s158 = sphi 0, %s142
  $region4: #{_fused_gemm_impl.1} parent=0 // loop_header_branch
    %13 = sbr.rel (%p11) target = $region8
  $region5: #{_fused_gemm_impl.1} parent=0 // loop_body
    %s15 = ssub.s32 %s10, 1
    %s16 = ssub.s32 %s10, 2
    %s23 = sadd.s32 1, %s18
    %p24 = scmp.ge.s32.totalorder %s23, 2
    %s25 = scalar_select %p24, 0, %s23
    %s26 = sadd.s32 1, %s17
    %s27 = scalar_select %p24, %s26, %s17
    %p28 = scmp.ge.s32.totalorder %s27, 1
    %s29 = scalar_select %p28, 0, %s27
    %s30 = ssub.s32 %s18, %s25
    %p31 = scmp.eq.s32.totalorder %s30, 0
    %s33 = sadd.s32 %s32, 1
    %s34 = scalar_select %p31, %s32, %s33
    %p37 = pneg %p31
    %p38 = scmp.eq.s32.totalorder %s10, 1
    %p39 = por %p37, %p38
    %p40 = scmp.ne.s32.totalorder %s32, %s35
    %p41 = scmp.eq.s32.totalorder %s10, 0
    %p42 = por %p40, %p41
    %p43 = scmp.ne.s32.totalorder %s32, %s35
    %p44 = scmp.eq.s32.totalorder %s15, 1
    %p45 = por %p43, %p44
    %p46 = scmp.ne.s32.totalorder %s35, %s36
    %p47 = scmp.eq.s32.totalorder %s15, 0
    %p48 = por %p46, %p47
    %p49 = scmp.ne.s32.totalorder %s35, %s36
    %p50 = scmp.eq.s32.totalorder %s16, 1
    %p51 = por %p49, %p50
    %p53 = scmp.ne.s32.totalorder %s36, %s52
    %p54 = scmp.eq.s32.totalorder %s16, 0
    %p55 = por %p53, %p54
    %s56 = ssub.s32 %s17, %s29
    %p57 = scmp.eq.s32.totalorder %s56, 0
    %s59 = sadd.s32 %s58, 1
    %s60 = scalar_select %p57, %s58, %s59
    %p63 = pneg %p57
    %p64 = scmp.eq.s32.totalorder %s10, 1
    %p65 = por %p63, %p64
    %p66 = scmp.ne.s32.totalorder %s58, %s61
    %p67 = scmp.eq.s32.totalorder %s10, 0
    %p68 = por %p66, %p67
    %p69 = scmp.ne.s32.totalorder %s58, %s61
    %p70 = scmp.eq.s32.totalorder %s15, 1
    %p71 = por %p69, %p70
    %p72 = scmp.ne.s32.totalorder %s61, %s62
    %p73 = scmp.eq.s32.totalorder %s15, 0
    %p74 = por %p72, %p73
    %p75 = scmp.ne.s32.totalorder %s61, %s62
    %p76 = scmp.eq.s32.totalorder %s16, 1
    %p77 = por %p75, %p76
    %p79 = scmp.ne.s32.totalorder %s62, %s78
    %p80 = scmp.eq.s32.totalorder %s16, 0
    %p81 = por %p79, %p80
    %s82 = ssub.s32 %s17, %s29
    %p83 = scmp.eq.s32.totalorder %s82, 0
    %s85 = sadd.s32 %s84, 1
    %s86 = scalar_select %p83, %s84, %s85
    %p89 = pneg %p83
    %p90 = scmp.eq.s32.totalorder %s10, 1
    %p91 = por %p89, %p90
    %p92 = scmp.ne.s32.totalorder %s84, %s87
    %p93 = scmp.eq.s32.totalorder %s10, 0
    %p94 = por %p92, %p93
    %p95 = scmp.ne.s32.totalorder %s84, %s87
    %p96 = scmp.eq.s32.totalorder %s15, 1
    %p97 = por %p95, %p96
    %p98 = scmp.ne.s32.totalorder %s87, %s88
    %p99 = scmp.eq.s32.totalorder %s15, 0
    %p100 = por %p98, %p99
    %p101 = scmp.ne.s32.totalorder %s87, %s88
    %p102 = scmp.eq.s32.totalorder %s16, 1
    %p103 = por %p101, %p102
    %p105 = scmp.ne.s32.totalorder %s88, %s104
    %p106 = scmp.eq.s32.totalorder %s16, 0
    %p107 = por %p105, %p106
    %s108 = ssub.s32 %s17, %s29
    %p109 = scmp.eq.s32.totalorder %s108, 0
    %s111 = sadd.s32 %s110, 1
    %s112 = scalar_select %p109, %s110, %s111
    %p115 = pneg %p109
    %p116 = scmp.eq.s32.totalorder %s10, 1
    %p117 = por %p115, %p116
    %p118 = scmp.ne.s32.totalorder %s110, %s113
    %p119 = scmp.eq.s32.totalorder %s10, 0
    %p120 = por %p118, %p119
    %p121 = scmp.ne.s32.totalorder %s110, %s113
    %p122 = scmp.eq.s32.totalorder %s15, 1
    %p123 = por %p121, %p122
    %p124 = scmp.ne.s32.totalorder %s113, %s114
    %p125 = scmp.eq.s32.totalorder %s15, 0
    %p126 = por %p124, %p125
    %p127 = scmp.ne.s32.totalorder %s113, %s114
    %p128 = scmp.eq.s32.totalorder %s16, 1
    %p129 = por %p127, %p128
    %p131 = scmp.ne.s32.totalorder %s114, %s130
    %p132 = scmp.eq.s32.totalorder %s16, 0
    %p133 = por %p131, %p132
    %s134 = ssub.s32 %s18, %s25
    %s135 = ssub.s32 %s17, %s29
    %s136 = sor.u32 %s134, %s135
    %p137 = scmp.eq.s32.totalorder %s136, 0
    %s139 = sadd.s32 %s138, 1
    %s140 = scalar_select %p137, %s138, %s139
    %p143 = pneg %p137
    %p144 = scmp.eq.s32.totalorder %s10, 1
    %p145 = por %p143, %p144
    %p146 = scmp.ne.s32.totalorder %s138, %s141
    %p147 = scmp.eq.s32.totalorder %s10, 0
    %p148 = por %p146, %p147
    %p149 = scmp.ne.s32.totalorder %s138, %s141
    %p150 = scmp.eq.s32.totalorder %s15, 1
    %p151 = por %p149, %p150
    %p152 = scmp.ne.s32.totalorder %s141, %s142
    %p153 = scmp.eq.s32.totalorder %s15, 0
    %p154 = por %p152, %p153
    %p155 = scmp.ne.s32.totalorder %s141, %s142
    %p156 = scmp.eq.s32.totalorder %s16, 1
    %p157 = por %p155, %p156
    %p159 = scmp.ne.s32.totalorder %s142, %s158
    %p160 = scmp.eq.s32.totalorder %s16, 0
    %p161 = por %p159, %p160
    %p162 = scmp.le.s32.totalorder 1, %s10
    %p163 = scmp.lt.s32.totalorder %s10, 3
    %p164 = pnand %p162, %p163
    %p165 = pneg %p164
    // Predicated region
    $region9: #{_fused_gemm_impl.1} parent=5 // pred_check
      _
    $region10: #{_fused_gemm_impl.1} parent=5 // pred_check_branch
      %167 = sbr.rel (%p164) target = $region12
    $region11: #{_fused_gemm_impl.1} parent=5 // pred_region
      %s168 = ssub.s32 %s10, 1
      // Predicated region
      $region13: #{_fused_gemm_impl.1} parent=11 // pred_check
        %p169 = pneg %p74
      $region14: #{_fused_gemm_impl.1} parent=11 // pred_check_branch
        %171 = sbr.rel (%p169) target = $region16
      $region15: #{_fused_gemm_impl.1} parent=11 // pred_region
        %p172 = scmp.lt.s32.totalorder %s19, 0
        %s173 = scalar_select %p172, %s19, 0
        %s174 = smul.addr %s173, 4
        %s175 = scalar_lea.vmem %s1, %s174
      $region16: #{_fused_gemm_impl.1} parent=11 // pred_fallthru
        _
      // Predicated region
      $region17: #{_fused_gemm_impl.1} parent=11 // pred_check
        %p176 = pneg %p100
      $region18: #{_fused_gemm_impl.1} parent=11 // pred_check_branch
        %178 = sbr.rel (%p176) target = $region20
      $region19: #{_fused_gemm_impl.1} parent=11 // pred_region
        %p179 = scmp.lt.s32.totalorder %s19, 0
        %s180 = scalar_select %p179, %s19, 0
        %s181 = scalar_lea.vmem %s2, %s180
      $region20: #{_fused_gemm_impl.1} parent=11 // pred_fallthru
        _
      // Predicated region
      $region21: #{_fused_gemm_impl.1} parent=11 // pred_check
        %p182 = pneg %p126
      $region22: #{_fused_gemm_impl.1} parent=11 // pred_check_branch
        %184 = sbr.rel (%p182) target = $region24
      $region23: #{_fused_gemm_impl.1} parent=11 // pred_region
        %p185 = scmp.lt.s32.totalorder %s19, 0
        %s186 = scalar_select %p185, %s19, 0
        %s187 = scalar_lea.vmem %s3, %s186
      $region24: #{_fused_gemm_impl.1} parent=11 // pred_fallthru
        _
    $region12: #{_fused_gemm_impl.1} parent=5 // pred_fallthru
      _
    %p188 = scmp.lt.s32.totalorder %s10, 2
    // Predicated region
    $region25: #{_fused_gemm_impl.1} parent=5 // pred_check
      %p189 = pneg %p188
    $region26: #{_fused_gemm_impl.1} parent=5 // pred_check_branch
      %191 = sbr.rel (%p189) target = $region28
    $region27: #{_fused_gemm_impl.1} parent=5 // pred_region
      // Predicated region
      $region29: #{_fused_gemm_impl.1} parent=27 // pred_check
        %p192 = pneg %p42
      $region30: #{_fused_gemm_impl.1} parent=27 // pred_check_branch
        %194 = sbr.rel (%p192) target = $region32
      $region31: #{_fused_gemm_impl.1} parent=27 // pred_region
        %s195 = smul.u32 32, %s18
        %p196 = scmp.lt.s32.totalorder %s195, 63
        %s197 = scalar_select %p196, %s195, 63
        %s198 = smul.addr %s197, 2
        %s199 = smul.addr %s198, 4
        %s200 = scalar_lea.vmem %s0, %s199
        %s201 = smul.u32 32, %s18
      $region32: #{_fused_gemm_impl.1} parent=27 // pred_fallthru
        _
    $region28: #{_fused_gemm_impl.1} parent=5 // pred_fallthru
      _
    %p202 = scmp.le.s32.totalorder 1, %s10
    %p203 = scmp.lt.s32.totalorder %s10, 3
    %p204 = pnand %p202, %p203
    %p205 = pneg %p204
    // Predicated region
    $region33: #{_fused_gemm_impl.1} parent=5 // pred_check
      _
    $region34: #{_fused_gemm_impl.1} parent=5 // pred_check_branch
      %207 = sbr.rel (%p204) target = $region36
    $region35: #{_fused_gemm_impl.1} parent=5 // pred_region
      %s208 = ssub.s32 %s10, 1
      %s209 = smul.u32 32, %s20
      %p210 = scmp.lt.s32.totalorder %s209, 63
      %s211 = scalar_select %p210, %s209, 63
      %s212 = smul.addr %s211, 2
      %s213 = smul.addr %s212, 4
      %s214 = scalar_lea.vmem %s0, %s213
      %p215 = pneg %p48
      %p216 = pneg %p45
      %p217 = scmp.lt.s32.totalorder %s19, 0
      %s218 = scalar_select %p217, %s19, 0
      %s219 = smul.addr %s218, 4
      %s220 = scalar_lea.vmem %s1, %s219
      %p221 = pneg %p74
      %p222 = pneg %p71
      %p223 = scmp.lt.s32.totalorder %s19, 0
      %s224 = scalar_select %p223, %s19, 0
      %s225 = scalar_lea.vmem %s2, %s224
      %p226 = pneg %p100
      %p227 = pneg %p97
      %p228 = scmp.lt.s32.totalorder %s19, 0
      %s229 = scalar_select %p228, %s19, 0
      %s230 = scalar_lea.vmem %s3, %s229
      %p231 = pneg %p126
      %p232 = pneg %p123
      %p233 = pneg %p154
      %p234 = pneg %p151
      %s235 = smul.u32 32, %s20
      %p236 = scmp.lt.s32.totalorder %s235, 63
      %s237 = scalar_select %p236, %s235, 63
      %p238 = scmp.lt.s32.totalorder %s19, 0
      %s239 = scalar_select %p238, %s19, 0
      %s240 = sadd.s32 %s239, %s237
      %s241 = smul.addr %s240, 4
      %s242 = scalar_lea.vmem %s4, %s241
      %s243 = smul.u32 32, %s20
      %p244 = scmp.lt.s32.totalorder %s243, 63
      %s245 = scalar_select %p244, %s243, 63
      %s246 = smul.addr %s245, 2
      %s247 = smul.addr %s246, 4
      %s248 = scalar_lea.vmem %s0, %s247
      %s249 = smul.u32 32, %s20
      %p250 = scmp.lt.s32.totalorder %s19, 0
      %s251 = scalar_select %p250, %s19, 0
      %s252 = smul.addr %s251, 4
      %s253 = scalar_lea.vmem %s1, %s252
      %p254 = scmp.lt.s32.totalorder %s19, 0
      %s255 = scalar_select %p254, %s19, 0
      %s256 = scalar_lea.vmem %s2, %s255
      %p257 = scmp.lt.s32.totalorder %s19, 0
      %s258 = scalar_select %p257, %s19, 0
      %s259 = scalar_lea.vmem %s3, %s258
      %s260 = smul.u32 32, %s20
      %p261 = scmp.lt.s32.totalorder %s260, 63
      %s262 = scalar_select %p261, %s260, 63
      %p263 = scmp.lt.s32.totalorder %s19, 0
      %s264 = scalar_select %p263, %s19, 0
      %s265 = sadd.s32 %s264, %s262
      %s266 = smul.addr %s265, 4
      %s267 = scalar_lea.vmem %s4, %s266
      %s268 = smul.u32 32, %s20
      %v270 = vld [vmem:[%s248] sm:$0xff]
      %v271 = vld [vmem:[%s248 + $0x8] sm:$0xff]
      %v272 = vld [vmem:[%s248 + $0x10] sm:$0xff]
      %v273 = vld [vmem:[%s248 + $0x18] sm:$0xff]
      %v274 = vld [vmem:[%s248 + $0x20] sm:$0xff]
      %v275 = vld [vmem:[%s248 + $0x28] sm:$0xff]
      %v276 = vld [vmem:[%s248 + $0x30] sm:$0xff]
      %v277 = vld [vmem:[%s248 + $0x38] sm:$0xff]
      %v278 = vld [vmem:[%s248 + $0x40] sm:$0xff]
      %v279 = vld [vmem:[%s248 + $0x48] sm:$0xff]
      %v280 = vld [vmem:[%s248 + $0x50] sm:$0xff]
      %v281 = vld [vmem:[%s248 + $0x58] sm:$0xff]
      %v282 = vld [vmem:[%s248 + $0x60] sm:$0xff]
      %v283 = vld [vmem:[%s248 + $0x68] sm:$0xff]
      %v284 = vld [vmem:[%s248 + $0x70] sm:$0xff]
      %v285 = vld [vmem:[%s248 + $0x78] sm:$0xff]
      %v286 = vld [vmem:[%s248 + $0x80] sm:$0xff]
      %v287 = vld [vmem:[%s248 + $0x88] sm:$0xff]
      %v288 = vld [vmem:[%s248 + $0x90] sm:$0xff]
      %v289 = vld [vmem:[%s248 + $0x98] sm:$0xff]
      %v290 = vld [vmem:[%s248 + $0xa0] sm:$0xff]
      %v291 = vld [vmem:[%s248 + $0xa8] sm:$0xff]
      %v292 = vld [vmem:[%s248 + $0xb0] sm:$0xff]
      %v293 = vld [vmem:[%s248 + $0xb8] sm:$0xff]
      %v294 = vld [vmem:[%s248 + $0xc0] sm:$0xff]
      %v295 = vld [vmem:[%s248 + $0xc8] sm:$0xff]
      %v296 = vld [vmem:[%s248 + $0xd0] sm:$0xff]
      %v297 = vld [vmem:[%s248 + $0xd8] sm:$0xff]
      %v298 = vld [vmem:[%s248 + $0xe0] sm:$0xff]
      %v299 = vld [vmem:[%s248 + $0xe8] sm:$0xff]
      %v300 = vld [vmem:[%s248 + $0xf0] sm:$0xff]
      %v301 = vld [vmem:[%s248 + $0xf8] sm:$0xff]
      %v302 = vld [vmem:[%s253] sm:$0xf]
      %v303 = vld [vmem:[%s253 + $0x4] sm:$0xf]
      %v304 = vld [vmem:[%s253 + $0x8] sm:$0xf]
      %v305 = vld [vmem:[%s253 + $0xc] sm:$0xf]
      %v306 = vld [vmem:[%s253 + $0x10] sm:$0xf]
      %v307 = vld [vmem:[%s253 + $0x14] sm:$0xf]
      %v308 = vld [vmem:[%s253 + $0x18] sm:$0xf]
      %v309 = vld [vmem:[%s253 + $0x1c] sm:$0xf]
      %v310 = vld [vmem:[%s253 + $0x20] sm:$0xf]
      %v311 = vld [vmem:[%s253 + $0x24] sm:$0xf]
      %v312 = vld [vmem:[%s253 + $0x28] sm:$0xf]
      %v313 = vld [vmem:[%s253 + $0x2c] sm:$0xf]
      %v314 = vld [vmem:[%s253 + $0x30] sm:$0xf]
      %v315 = vld [vmem:[%s253 + $0x34] sm:$0xf]
      %v316 = vld [vmem:[%s253 + $0x38] sm:$0xf]
      %v317 = vld [vmem:[%s253 + $0x3c] sm:$0xf]
      %v318 = vld [vmem:[%s253 + $0x40] sm:$0xf]
      %v319 = vld [vmem:[%s253 + $0x44] sm:$0xf]
      %v320 = vld [vmem:[%s253 + $0x48] sm:$0xf]
      %v321 = vld [vmem:[%s253 + $0x4c] sm:$0xf]
      %v322 = vld [vmem:[%s253 + $0x50] sm:$0xf]
      %v323 = vld [vmem:[%s253 + $0x54] sm:$0xf]
      %v324 = vld [vmem:[%s253 + $0x58] sm:$0xf]
      %v325 = vld [vmem:[%s253 + $0x5c] sm:$0xf]
      %v326 = vld [vmem:[%s253 + $0x60] sm:$0xf]
      %v327 = vld [vmem:[%s253 + $0x64] sm:$0xf]
      %v328 = vld [vmem:[%s253 + $0x68] sm:$0xf]
      %v329 = vld [vmem:[%s253 + $0x6c] sm:$0xf]
      %v330 = vld [vmem:[%s253 + $0x70] sm:$0xf]
      %v331 = vld [vmem:[%s253 + $0x74] sm:$0xf]
      %v332 = vld [vmem:[%s253 + $0x78] sm:$0xf]
      %v333 = vld [vmem:[%s253 + $0x7c] sm:$0xf]
      %v366 = vunpack.c.l.b16 %v270
      %v367 = vunpack.c.h.b16 %v270
      %v368 = vunpack.c.l.b16 %v271
      %v369 = vunpack.c.h.b16 %v271
      %v370 = vunpack.c.l.b16 %v272
      %v371 = vunpack.c.h.b16 %v272
      %v372 = vunpack.c.l.b16 %v273
      %v373 = vunpack.c.h.b16 %v273
      %v374 = vunpack.c.l.b16 %v274
      %v375 = vunpack.c.h.b16 %v274
      %v376 = vunpack.c.l.b16 %v275
      %v377 = vunpack.c.h.b16 %v275
      %v378 = vunpack.c.l.b16 %v276
      %v379 = vunpack.c.h.b16 %v276
      %v380 = vunpack.c.l.b16 %v277
      %v381 = vunpack.c.h.b16 %v277
      %v382 = vunpack.c.l.b16 %v278
      %v383 = vunpack.c.h.b16 %v278
      %v384 = vunpack.c.l.b16 %v279
      %v385 = vunpack.c.h.b16 %v279
      %v386 = vunpack.c.l.b16 %v280
      %v387 = vunpack.c.h.b16 %v280
      %v388 = vunpack.c.l.b16 %v281
      %v389 = vunpack.c.h.b16 %v281
      %v390 = vunpack.c.l.b16 %v282
      %v391 = vunpack.c.h.b16 %v282
      %v392 = vunpack.c.l.b16 %v283
      %v393 = vunpack.c.h.b16 %v283
      %v394 = vunpack.c.l.b16 %v284
      %v395 = vunpack.c.h.b16 %v284
      %v396 = vunpack.c.l.b16 %v285
      %v397 = vunpack.c.h.b16 %v285
      %v398 = vunpack.c.l.b16 %v286
      %v399 = vunpack.c.h.b16 %v286
      %v400 = vunpack.c.l.b16 %v287
      %v401 = vunpack.c.h.b16 %v287
      %v402 = vunpack.c.l.b16 %v288
      %v403 = vunpack.c.h.b16 %v288
      %v404 = vunpack.c.l.b16 %v289
      %v405 = vunpack.c.h.b16 %v289
      %v406 = vunpack.c.l.b16 %v290
      %v407 = vunpack.c.h.b16 %v290
      %v408 = vunpack.c.l.b16 %v291
      %v409 = vunpack.c.h.b16 %v291
      %v410 = vunpack.c.l.b16 %v292
      %v411 = vunpack.c.h.b16 %v292
      %v412 = vunpack.c.l.b16 %v293
      %v413 = vunpack.c.h.b16 %v293
      %v414 = vunpack.c.l.b16 %v294
      %v415 = vunpack.c.h.b16 %v294
      %v416 = vunpack.c.l.b16 %v295
      %v417 = vunpack.c.h.b16 %v295
      %v418 = vunpack.c.l.b16 %v296
      %v419 = vunpack.c.h.b16 %v296
      %v420 = vunpack.c.l.b16 %v297
      %v421 = vunpack.c.h.b16 %v297
      %v422 = vunpack.c.l.b16 %v298
      %v423 = vunpack.c.h.b16 %v298
      %v424 = vunpack.c.l.b16 %v299
      %v425 = vunpack.c.h.b16 %v299
      %v426 = vunpack.c.l.b16 %v300
      %v427 = vunpack.c.h.b16 %v300
      %v428 = vunpack.c.l.b16 %v301
      %v429 = vunpack.c.h.b16 %v301
      %v430 = vpack.c.b16 %v368, %v366
      %v431 = vpack.c.b16 %v369, %v367
      %v432 = vpack.c.b16 %v372, %v370
      %v433 = vpack.c.b16 %v373, %v371
      %v434 = vpack.c.b16 %v376, %v374
      %v435 = vpack.c.b16 %v377, %v375
      %v436 = vpack.c.b16 %v380, %v378
      %v437 = vpack.c.b16 %v381, %v379
      %v438 = vpack.c.b16 %v384, %v382
      %v439 = vpack.c.b16 %v385, %v383
      %v440 = vpack.c.b16 %v388, %v386
      %v441 = vpack.c.b16 %v389, %v387
      %v442 = vpack.c.b16 %v392, %v390
      %v443 = vpack.c.b16 %v393, %v391
      %v444 = vpack.c.b16 %v396, %v394
      %v445 = vpack.c.b16 %v397, %v395
      %v446 = vpack.c.b16 %v400, %v398
      %v447 = vpack.c.b16 %v401, %v399
      %v448 = vpack.c.b16 %v404, %v402
      %v449 = vpack.c.b16 %v405, %v403
      %v450 = vpack.c.b16 %v408, %v406
      %v451 = vpack.c.b16 %v409, %v407
      %v452 = vpack.c.b16 %v412, %v410
      %v453 = vpack.c.b16 %v413, %v411
      %v454 = vpack.c.b16 %v416, %v414
      %v455 = vpack.c.b16 %v417, %v415
      %v456 = vpack.c.b16 %v420, %v418
      %v457 = vpack.c.b16 %v421, %v419
      %v458 = vpack.c.b16 %v424, %v422
      %v459 = vpack.c.b16 %v425, %v423
      %v460 = vpack.c.b16 %v428, %v426
      %v461 = vpack.c.b16 %v429, %v427
      %v526 = vunpack.c.l.b16 %v302
      %v527 = vunpack.c.l.b16 %v303
      %v528 = vunpack.c.l.b16 %v304
      %v529 = vunpack.c.l.b16 %v305
      %v530 = vunpack.c.l.b16 %v306
      %v531 = vunpack.c.l.b16 %v307
      %v532 = vunpack.c.l.b16 %v308
      %v533 = vunpack.c.l.b16 %v309
      %v534 = vunpack.c.l.b16 %v310
      %v535 = vunpack.c.l.b16 %v311
      %v536 = vunpack.c.l.b16 %v312
      %v537 = vunpack.c.l.b16 %v313
      %v538 = vunpack.c.l.b16 %v314
      %v539 = vunpack.c.l.b16 %v315
      %v540 = vunpack.c.l.b16 %v316
      %v541 = vunpack.c.l.b16 %v317
      %v542 = vunpack.c.l.b16 %v318
      %v543 = vunpack.c.l.b16 %v319
      %v544 = vunpack.c.l.b16 %v320
      %v545 = vunpack.c.l.b16 %v321
      %v546 = vunpack.c.l.b16 %v322
      %v547 = vunpack.c.l.b16 %v323
      %v548 = vunpack.c.l.b16 %v324
      %v549 = vunpack.c.l.b16 %v325
      %v550 = vunpack.c.l.b16 %v326
      %v551 = vunpack.c.l.b16 %v327
      %v552 = vunpack.c.l.b16 %v328
      %v553 = vunpack.c.l.b16 %v329
      %v554 = vunpack.c.l.b16 %v330
      %v555 = vunpack.c.l.b16 %v331
      %v556 = vunpack.c.l.b16 %v332
      %v557 = vunpack.c.l.b16 %v333
      %v558 = vpack.c.b16 %v527, %v526
      %v559 = vpack.c.b16 %v529, %v528
      %v560 = vpack.c.b16 %v531, %v530
      %v561 = vpack.c.b16 %v533, %v532
      %v562 = vpack.c.b16 %v535, %v534
      %v563 = vpack.c.b16 %v537, %v536
      %v564 = vpack.c.b16 %v539, %v538
      %v565 = vpack.c.b16 %v541, %v540
      %v566 = vpack.c.b16 %v543, %v542
      %v567 = vpack.c.b16 %v545, %v544
      %v568 = vpack.c.b16 %v547, %v546
      %v569 = vpack.c.b16 %v549, %v548
      %v570 = vpack.c.b16 %v551, %v550
      %v571 = vpack.c.b16 %v553, %v552
      %v572 = vpack.c.b16 %v555, %v554
      %v573 = vpack.c.b16 %v557, %v556
      %590 = vmatprep.subr.bf16.mxu0 0
      %591 = vmatpush1.bf16.msra.mxu0 %v558
      %592 = vmatprep.subr.bf16.mxu0 0
      %593 = vmatpush1.bf16.msra.mxu0 %v559
      %594 = vmatprep.subr.bf16.mxu0 0
      %595 = vmatpush1.bf16.msra.mxu0 %v560
      %596 = vmatprep.subr.bf16.mxu0 0
      %597 = vmatpush1.bf16.msra.mxu0 %v561
      %598 = vmatprep.subr.bf16.mxu0 0
      %599 = vmatpush1.bf16.msra.mxu0 %v562
      %600 = vmatprep.subr.bf16.mxu0 0
      %601 = vmatpush1.bf16.msra.mxu0 %v563
      %602 = vmatprep.subr.bf16.mxu0 0
      %603 = vmatpush1.bf16.msra.mxu0 %v564
      %604 = vmatprep.subr.bf16.mxu0 0
      %605 = vmatpush1.bf16.msra.mxu0 %v565
      %606 = vmatprep.subr.bf16.mxu0 0
      %607 = vmatpush1.bf16.msra.mxu0 %v566
      %608 = vmatprep.subr.bf16.mxu0 0
      %609 = vmatpush1.bf16.msra.mxu0 %v567
      %610 = vmatprep.subr.bf16.mxu0 0
      %611 = vmatpush1.bf16.msra.mxu0 %v568
      %612 = vmatprep.subr.bf16.mxu0 0
      %613 = vmatpush1.bf16.msra.mxu0 %v569
      %614 = vmatprep.subr.bf16.mxu0 0
      %615 = vmatpush1.bf16.msra.mxu0 %v570
      %616 = vmatprep.subr.bf16.mxu0 0
      %617 = vmatpush1.bf16.msra.mxu0 %v571
      %618 = vmatprep.subr.bf16.mxu0 0
      %619 = vmatpush1.bf16.msra.mxu0 %v572
      %620 = vmatprep.subr.bf16.mxu0 0
      %621 = vmatpush1.bf16.msra.mxu0 %v573
      %622 = vmatprep.mubr.bf16.mxu0 %v431
      %623 = vmatmul.mubr.bf16.gmra.mrb[0].mxu0 %v430
      %v624 = vpop.f32.mrb[0].mxu0
      %v625 = vadd.f32 0.0, %v624
      %v626 = vpop.f32.mrb[0].mxu0
      %v627 = vpop.f32.mrb[0].mxu0
      %v628 = vadd.f32 0.0, %v627
      %v629 = vpop.f32.mrb[0].mxu0
      %630 = vmatprep.mubr.bf16.mxu0 %v433
      %631 = vmatmul.mubr.bf16.gmra.mrb[0].mxu0 %v432
      %v632 = vpop.f32.mrb[0].mxu0
      %v633 = vadd.f32 0.0, %v632
      %v634 = vpop.f32.mrb[0].mxu0
      %v635 = vpop.f32.mrb[0].mxu0
      %v636 = vadd.f32 0.0, %v635
      %v637 = vpop.f32.mrb[0].mxu0
      %638 = vmatprep.mubr.bf16.mxu0 %v435
      %639 = vmatmul.mubr.bf16.gmra.mrb[0].mxu0 %v434
      %v640 = vpop.f32.mrb[0].mxu0
      %v641 = vadd.f32 0.0, %v640
      %v642 = vpop.f32.mrb[0].mxu0
      %v643 = vpop.f32.mrb[0].mxu0
      %v644 = vadd.f32 0.0, %v643
      %v645 = vpop.f32.mrb[0].mxu0
      %646 = vmatprep.mubr.bf16.mxu0 %v437
      %647 = vmatmul.mubr.bf16.gmra.mrb[0].mxu0 %v436
      %v648 = vpop.f32.mrb[0].mxu0
      %v649 = vadd.f32 0.0, %v648
      %v650 = vpop.f32.mrb[0].mxu0
      %v651 = vpop.f32.mrb[0].mxu0
      %v652 = vadd.f32 0.0, %v651
      %v653 = vpop.f32.mrb[0].mxu0
      %654 = vmatprep.mubr.bf16.mxu0 %v439
      %655 = vmatmul.mubr.bf16.gmra.mrb[0].mxu0 %v438
      %v656 = vpop.f32.mrb[0].mxu0
      %v657 = vadd.f32 0.0, %v656
      %v658 = vpop.f32.mrb[0].mxu0
      %v659 = vpop.f32.mrb[0].mxu0
      %v660 = vadd.f32 0.0, %v659
      %v661 = vpop.f32.mrb[0].mxu0
      %662 = vmatprep.mubr.bf16.mxu0 %v441
      %663 = vmatmul.mubr.bf16.gmra.mrb[0].mxu0 %v440
      %v664 = vpop.f32.mrb[0].mxu0
      %v665 = vadd.f32 0.0, %v664
      %v666 = vpop.f32.mrb[0].mxu0
      %v667 = vpop.f32.mrb[0].mxu0
      %v668 = vadd.f32 0.0, %v667
      %v669 = vpop.f32.mrb[0].mxu0
      %670 = vmatprep.mubr.bf16.mxu0 %v443
      %671 = vmatmul.mubr.bf16.gmra.mrb[0].mxu0 %v442
      %v672 = vpop.f32.mrb[0].mxu0
      %v673 = vadd.f32 0.0, %v672
      %v674 = vpop.f32.mrb[0].mxu0
      %v675 = vpop.f32.mrb[0].mxu0
      %v676 = vadd.f32 0.0, %v675
      %v677 = vpop.f32.mrb[0].mxu0
      %678 = vmatprep.mubr.bf16.mxu0 %v445
      %679 = vmatmul.mubr.bf16.gmra.mrb[0].mxu0 %v444
      %v680 = vpop.f32.mrb[0].mxu0
      %v681 = vadd.f32 0.0, %v680
      %v682 = vpop.f32.mrb[0].mxu0
      %v683 = vpop.f32.mrb[0].mxu0
      %v684 = vadd.f32 0.0, %v683
      %v685 = vpop.f32.mrb[0].mxu0
      %686 = vmatprep.mubr.bf16.mxu0 %v447
      %687 = vmatmul.mubr.bf16.gmra.mrb[0].mxu0 %v446
      %v688 = vpop.f32.mrb[0].mxu0
      %v689 = vadd.f32 0.0, %v688
      %v690 = vpop.f32.mrb[0].mxu0
      %v691 = vpop.f32.mrb[0].mxu0
      %v692 = vadd.f32 0.0, %v691
      %v693 = vpop.f32.mrb[0].mxu0
      %694 = vmatprep.mubr.bf16.mxu0 %v449
      %695 = vmatmul.mubr.bf16.gmra.mrb[0].mxu0 %v448
      %v696 = vpop.f32.mrb[0].mxu0
      %v697 = vadd.f32 0.0, %v696
      %v698 = vpop.f32.mrb[0].mxu0
      %v699 = vpop.f32.mrb[0].mxu0
      %v700 = vadd.f32 0.0, %v699
      %v701 = vpop.f32.mrb[0].mxu0
      %702 = vmatprep.mubr.bf16.mxu0 %v451
      %703 = vmatmul.mubr.bf16.gmra.mrb[0].mxu0 %v450
      %v704 = vpop.f32.mrb[0].mxu0
      %v705 = vadd.f32 0.0, %v704
      %v706 = vpop.f32.mrb[0].mxu0
      %v707 = vpop.f32.mrb[0].mxu0
      %v708 = vadd.f32 0.0, %v707
      %v709 = vpop.f32.mrb[0].mxu0
      %710 = vmatprep.mubr.bf16.mxu0 %v453
      %711 = vmatmul.mubr.bf16.gmra.mrb[0].mxu0 %v452
      %v712 = vpop.f32.mrb[0].mxu0
      %v713 = vadd.f32 0.0, %v712
      %v714 = vpop.f32.mrb[0].mxu0
      %v715 = vpop.f32.mrb[0].mxu0
      %v716 = vadd.f32 0.0, %v715
      %v717 = vpop.f32.mrb[0].mxu0
      %718 = vmatprep.mubr.bf16.mxu0 %v455
      %719 = vmatmul.mubr.bf16.gmra.mrb[0].mxu0 %v454
      %v720 = vpop.f32.mrb[0].mxu0
      %v721 = vadd.f32 0.0, %v720
      %v722 = vpop.f32.mrb[0].mxu0
      %v723 = vpop.f32.mrb[0].mxu0
      %v724 = vadd.f32 0.0, %v723
      %v725 = vpop.f32.mrb[0].mxu0
      %726 = vmatprep.mubr.bf16.mxu0 %v457
      %727 = vmatmul.mubr.bf16.gmra.mrb[0].mxu0 %v456
      %v728 = vpop.f32.mrb[0].mxu0
      %v729 = vadd.f32 0.0, %v728
      %v730 = vpop.f32.mrb[0].mxu0
      %v731 = vpop.f32.mrb[0].mxu0
      %v732 = vadd.f32 0.0, %v731
      %v733 = vpop.f32.mrb[0].mxu0
      %734 = vmatprep.mubr.bf16.mxu0 %v459
      %735 = vmatmul.mubr.bf16.gmra.mrb[0].mxu0 %v458
      %v736 = vpop.f32.mrb[0].mxu0
      %v737 = vadd.f32 0.0, %v736
      %v738 = vpop.f32.mrb[0].mxu0
      %v739 = vpop.f32.mrb[0].mxu0
      %v740 = vadd.f32 0.0, %v739
      %v741 = vpop.f32.mrb[0].mxu0
      %742 = vmatprep.mubr.bf16.mxu0 %v461
      %743 = vmatmul.mubr.bf16.gmra.mrb[0].mxu0 %v460
      %v744 = vpop.f32.mrb[0].mxu0
      %v745 = vadd.f32 0.0, %v744
      %v746 = vpop.f32.mrb[0].mxu0
      %v747 = vpop.f32.mrb[0].mxu0
      %v748 = vadd.f32 0.0, %v747
      %v749 = vpop.f32.mrb[0].mxu0
      %750 = vdwg.mxu0
      %v751 = vld [vmem:[%s256] sm:$0x1]
      %v753 = vlaneseq
      %v754 = vshrl.u32 %v753, 7
      %v755 = vsub.s32 0, %v754
      %v756 = vrot.slane %v751, %v755
      %v758 = vmul.f32 %v625, %v756
      %v759 = vmul.f32 %v628, %v756
      %v760 = vmul.f32 %v633, %v756
      %v761 = vmul.f32 %v636, %v756
      %v762 = vmul.f32 %v641, %v756
      %v763 = vmul.f32 %v644, %v756
      %v764 = vmul.f32 %v649, %v756
      %v765 = vmul.f32 %v652, %v756
      %v766 = vmul.f32 %v657, %v756
      %v767 = vmul.f32 %v660, %v756
      %v768 = vmul.f32 %v665, %v756
      %v769 = vmul.f32 %v668, %v756
      %v770 = vmul.f32 %v673, %v756
      %v771 = vmul.f32 %v676, %v756
      %v772 = vmul.f32 %v681, %v756
      %v773 = vmul.f32 %v684, %v756
      %v774 = vmul.f32 %v689, %v756
      %v775 = vmul.f32 %v692, %v756
      %v776 = vmul.f32 %v697, %v756
      %v777 = vmul.f32 %v700, %v756
      %v778 = vmul.f32 %v705, %v756
      %v779 = vmul.f32 %v708, %v756
      %v780 = vmul.f32 %v713, %v756
      %v781 = vmul.f32 %v716, %v756
      %v782 = vmul.f32 %v721, %v756
      %v783 = vmul.f32 %v724, %v756
      %v784 = vmul.f32 %v729, %v756
      %v785 = vmul.f32 %v732, %v756
      %v786 = vmul.f32 %v737, %v756
      %v787 = vmul.f32 %v740, %v756
      %v788 = vmul.f32 %v745, %v756
      %v789 = vmul.f32 %v748, %v756
      %v790 = vld [vmem:[%s259] sm:$0x1]
      %v792 = vlaneseq
      %v793 = vshrl.u32 %v792, 7
      %v794 = vsub.s32 0, %v793
      %v795 = vrot.slane %v790, %v794
      %v797 = vadd.f32 %v758, %v795
      %v798 = vadd.f32 %v759, %v795
      %v799 = vadd.f32 %v760, %v795
      %v800 = vadd.f32 %v761, %v795
      %v801 = vadd.f32 %v762, %v795
      %v802 = vadd.f32 %v763, %v795
      %v803 = vadd.f32 %v764, %v795
      %v804 = vadd.f32 %v765, %v795
      %v805 = vadd.f32 %v766, %v795
      %v806 = vadd.f32 %v767, %v795
      %v807 = vadd.f32 %v768, %v795
      %v808 = vadd.f32 %v769, %v795
      %v809 = vadd.f32 %v770, %v795
      %v810 = vadd.f32 %v771, %v795
      %v811 = vadd.f32 %v772, %v795
      %v812 = vadd.f32 %v773, %v795
      %v813 = vadd.f32 %v774, %v795
      %v814 = vadd.f32 %v775, %v795
      %v815 = vadd.f32 %v776, %v795
      %v816 = vadd.f32 %v777, %v795
      %v817 = vadd.f32 %v778, %v795
      %v818 = vadd.f32 %v779, %v795
      %v819 = vadd.f32 %v780, %v795
      %v820 = vadd.f32 %v781, %v795
      %v821 = vadd.f32 %v782, %v795
      %v822 = vadd.f32 %v783, %v795
      %v823 = vadd.f32 %v784, %v795
      %v824 = vadd.f32 %v785, %v795
      %v825 = vadd.f32 %v786, %v795
      %v826 = vadd.f32 %v787, %v795
      %v827 = vadd.f32 %v788, %v795
      %v828 = vadd.f32 %v789, %v795
      %v829 = vmax.f32 %v797, 0.0
      %v830 = vmax.f32 %v798, 0.0
      %v831 = vmax.f32 %v799, 0.0
      %v832 = vmax.f32 %v800, 0.0
      %v833 = vmax.f32 %v801, 0.0
      %v834 = vmax.f32 %v802, 0.0
      %v835 = vmax.f32 %v803, 0.0
      %v836 = vmax.f32 %v804, 0.0
      %v837 = vmax.f32 %v805, 0.0
      %v838 = vmax.f32 %v806, 0.0
      %v839 = vmax.f32 %v807, 0.0
      %v840 = vmax.f32 %v808, 0.0
      %v841 = vmax.f32 %v809, 0.0
      %v842 = vmax.f32 %v810, 0.0
      %v843 = vmax.f32 %v811, 0.0
      %v844 = vmax.f32 %v812, 0.0
      %v845 = vmax.f32 %v813, 0.0
      %v846 = vmax.f32 %v814, 0.0
      %v847 = vmax.f32 %v815, 0.0
      %v848 = vmax.f32 %v816, 0.0
      %v849 = vmax.f32 %v817, 0.0
      %v850 = vmax.f32 %v818, 0.0
      %v851 = vmax.f32 %v819, 0.0
      %v852 = vmax.f32 %v820, 0.0
      %v853 = vmax.f32 %v821, 0.0
      %v854 = vmax.f32 %v822, 0.0
      %v855 = vmax.f32 %v823, 0.0
      %v856 = vmax.f32 %v824, 0.0
      %v857 = vmax.f32 %v825, 0.0
      %v858 = vmax.f32 %v826, 0.0
      %v859 = vmax.f32 %v827, 0.0
      %v860 = vmax.f32 %v828, 0.0
      %v861 = vpack.c.bf16 %v830, %v829
      %v862 = vpack.c.bf16 %v832, %v831
      %v863 = vpack.c.bf16 %v834, %v833
      %v864 = vpack.c.bf16 %v836, %v835
      %v865 = vpack.c.bf16 %v838, %v837
      %v866 = vpack.c.bf16 %v840, %v839
      %v867 = vpack.c.bf16 %v842, %v841
      %v868 = vpack.c.bf16 %v844, %v843
      %v869 = vpack.c.bf16 %v846, %v845
      %v870 = vpack.c.bf16 %v848, %v847
      %v871 = vpack.c.bf16 %v850, %v849
      %v872 = vpack.c.bf16 %v852, %v851
      %v873 = vpack.c.bf16 %v854, %v853
      %v874 = vpack.c.bf16 %v856, %v855
      %v875 = vpack.c.bf16 %v858, %v857
      %v876 = vpack.c.bf16 %v860, %v859
      %v893 = vunpack.c.l.b16 %v861
      %v894 = vunpack.c.h.b16 %v861
      %v895 = vunpack.c.l.b16 %v862
      %v896 = vunpack.c.h.b16 %v862
      %v897 = vunpack.c.l.b16 %v863
      %v898 = vunpack.c.h.b16 %v863
      %v899 = vunpack.c.l.b16 %v864
      %v900 = vunpack.c.h.b16 %v864
      %v901 = vunpack.c.l.b16 %v865
      %v902 = vunpack.c.h.b16 %v865
      %v903 = vunpack.c.l.b16 %v866
      %v904 = vunpack.c.h.b16 %v866
      %v905 = vunpack.c.l.b16 %v867
      %v906 = vunpack.c.h.b16 %v867
      %v907 = vunpack.c.l.b16 %v868
      %v908 = vunpack.c.h.b16 %v868
      %v909 = vunpack.c.l.b16 %v869
      %v910 = vunpack.c.h.b16 %v869
      %v911 = vunpack.c.l.b16 %v870
      %v912 = vunpack.c.h.b16 %v870
      %v913 = vunpack.c.l.b16 %v871
      %v914 = vunpack.c.h.b16 %v871
      %v915 = vunpack.c.l.b16 %v872
      %v916 = vunpack.c.h.b16 %v872
      %v917 = vunpack.c.l.b16 %v873
      %v918 = vunpack.c.h.b16 %v873
      %v919 = vunpack.c.l.b16 %v874
      %v920 = vunpack.c.h.b16 %v874
      %v921 = vunpack.c.l.b16 %v875
      %v922 = vunpack.c.h.b16 %v875
      %v923 = vunpack.c.l.b16 %v876
      %v924 = vunpack.c.h.b16 %v876
      %v925 = vpack.c.b16 %v893, %v893
      %v926 = vpack.c.b16 %v894, %v894
      %v927 = vpack.c.b16 %v895, %v895
      %v928 = vpack.c.b16 %v896, %v896
      %v929 = vpack.c.b16 %v897, %v897
      %v930 = vpack.c.b16 %v898, %v898
      %v931 = vpack.c.b16 %v899, %v899
      %v932 = vpack.c.b16 %v900, %v900
      %v933 = vpack.c.b16 %v901, %v901
      %v934 = vpack.c.b16 %v902, %v902
      %v935 = vpack.c.b16 %v903, %v903
      %v936 = vpack.c.b16 %v904, %v904
      %v937 = vpack.c.b16 %v905, %v905
      %v938 = vpack.c.b16 %v906, %v906
      %v939 = vpack.c.b16 %v907, %v907
      %v940 = vpack.c.b16 %v908, %v908
      %v941 = vpack.c.b16 %v909, %v909
      %v942 = vpack.c.b16 %v910, %v910
      %v943 = vpack.c.b16 %v911, %v911
      %v944 = vpack.c.b16 %v912, %v912
      %v945 = vpack.c.b16 %v913, %v913
      %v946 = vpack.c.b16 %v914, %v914
      %v947 = vpack.c.b16 %v915, %v915
      %v948 = vpack.c.b16 %v916, %v916
      %v949 = vpack.c.b16 %v917, %v917
      %v950 = vpack.c.b16 %v918, %v918
      %v951 = vpack.c.b16 %v919, %v919
      %v952 = vpack.c.b16 %v920, %v920
      %v953 = vpack.c.b16 %v921, %v921
      %v954 = vpack.c.b16 %v922, %v922
      %v955 = vpack.c.b16 %v923, %v923
      %v956 = vpack.c.b16 %v924, %v924
      %989 = vst [vmem:[%s267] sm:$0xf] %v925
      %990 = vst [vmem:[%s267 + $0x4] sm:$0xf] %v926
      %991 = vst [vmem:[%s267 + $0x8] sm:$0xf] %v927
      %992 = vst [vmem:[%s267 + $0xc] sm:$0xf] %v928
      %993 = vst [vmem:[%s267 + $0x10] sm:$0xf] %v929
      %994 = vst [vmem:[%s267 + $0x14] sm:$0xf] %v930
      %995 = vst [vmem:[%s267 + $0x18] sm:$0xf] %v931
      %996 = vst [vmem:[%s267 + $0x1c] sm:$0xf] %v932
      %997 = vst [vmem:[%s267 + $0x20] sm:$0xf] %v933
      %998 = vst [vmem:[%s267 + $0x24] sm:$0xf] %v934
      %999 = vst [vmem:[%s267 + $0x28] sm:$0xf] %v935
      %1000 = vst [vmem:[%s267 + $0x2c] sm:$0xf] %v936
      %1001 = vst [vmem:[%s267 + $0x30] sm:$0xf] %v937
      %1002 = vst [vmem:[%s267 + $0x34] sm:$0xf] %v938
      %1003 = vst [vmem:[%s267 + $0x38] sm:$0xf] %v939
      %1004 = vst [vmem:[%s267 + $0x3c] sm:$0xf] %v940
      %1005 = vst [vmem:[%s267 + $0x40] sm:$0xf] %v941
      %1006 = vst [vmem:[%s267 + $0x44] sm:$0xf] %v942
      %1007 = vst [vmem:[%s267 + $0x48] sm:$0xf] %v943
      %1008 = vst [vmem:[%s267 + $0x4c] sm:$0xf] %v944
      %1009 = vst [vmem:[%s267 + $0x50] sm:$0xf] %v945
      %1010 = vst [vmem:[%s267 + $0x54] sm:$0xf] %v946
      %1011 = vst [vmem:[%s267 + $0x58] sm:$0xf] %v947
      %1012 = vst [vmem:[%s267 + $0x5c] sm:$0xf] %v948
      %1013 = vst [vmem:[%s267 + $0x60] sm:$0xf] %v949
      %1014 = vst [vmem:[%s267 + $0x64] sm:$0xf] %v950
      %1015 = vst [vmem:[%s267 + $0x68] sm:$0xf] %v951
      %1016 = vst [vmem:[%s267 + $0x6c] sm:$0xf] %v952
      %1017 = vst [vmem:[%s267 + $0x70] sm:$0xf] %v953
      %1018 = vst [vmem:[%s267 + $0x74] sm:$0xf] %v954
      %1019 = vst [vmem:[%s267 + $0x78] sm:$0xf] %v955
      %1020 = vst [vmem:[%s267 + $0x7c] sm:$0xf] %v956
      %s1021 = smul.u32 32, %s20
      %p1022 = scmp.lt.s32.totalorder %s1021, 63
      %s1023 = scalar_select %p1022, %s1021, 63
      %p1024 = scmp.lt.s32.totalorder %s19, 0
      %s1025 = scalar_select %p1024, %s19, 0
      %s1026 = sadd.s32 %s1025, %s1023
      %s1027 = smul.addr %s1026, 4
      %s1028 = scalar_lea.vmem %s4, %s1027
      // Predicated region
      $region37: #{_fused_gemm_impl.1} parent=35 // pred_check
        %p1029 = pneg %p151
      $region38: #{_fused_gemm_impl.1} parent=35 // pred_check_branch
        %1031 = sbr.rel (%p1029) target = $region40
      $region39: #{_fused_gemm_impl.1} parent=35 // pred_region
        %s1032 = smul.u32 32, %s20
      $region40: #{_fused_gemm_impl.1} parent=35 // pred_fallthru
        _
    $region36: #{_fused_gemm_impl.1} parent=5 // pred_fallthru
      _
    %p1033 = scmp.le.s32.totalorder 2, %s10
    // Predicated region
    $region41: #{_fused_gemm_impl.1} parent=5 // pred_check
      %p1034 = pneg %p1033
    $region42: #{_fused_gemm_impl.1} parent=5 // pred_check_branch
      %1036 = sbr.rel (%p1034) target = $region44
    $region43: #{_fused_gemm_impl.1} parent=5 // pred_region
      %s1037 = ssub.s32 %s10, 2
      // Predicated region
      $region45: #{_fused_gemm_impl.1} parent=43 // pred_check
        %p1038 = pneg %p157
      $region46: #{_fused_gemm_impl.1} parent=43 // pred_check_branch
        %1040 = sbr.rel (%p1038) target = $region48
      $region47: #{_fused_gemm_impl.1} parent=43 // pred_region
        %s1041 = smul.u32 32, %s22
        %p1042 = scmp.lt.s32.totalorder %s1041, 63
        %s1043 = scalar_select %p1042, %s1041, 63
        %p1044 = scmp.lt.s32.totalorder %s21, 0
        %s1045 = scalar_select %p1044, %s21, 0
        %s1046 = sadd.s32 %s1045, %s1043
        %s1047 = smul.addr %s1046, 4
        %s1048 = scalar_lea.vmem %s4, %s1047
      $region48: #{_fused_gemm_impl.1} parent=43 // pred_fallthru
        _
    $region44: #{_fused_gemm_impl.1} parent=5 // pred_fallthru
      _
  $region6: #{_fused_gemm_impl.1} parent=0 // loop_footer
    %s14 = sadd.s32 1, %s10
  $region7: #{_fused_gemm_impl.1} parent=0 // loop_footer_branch
    %9 = sbr.rel target = $region3
  $region8: #{_fused_gemm_impl.1} parent=0 // loop_exit
    _

</llo_original>
